<compile_context>
chip_gen: v5e
topology: v5e:2x2
jax: 0.10.0
libtpu: 0.0.40
codegen_flags: <defaults>
</compile_context>

<pallas_src>
import numpy as np
import jax
import jax.numpy as jnp
from jax.experimental import pallas as pl
from jax.experimental.pallas import tpu as pltpu

N_MULT_FACTOR = 2
LEAKY_SLOPE = 0.1
BN_EPS = 1e-5


def _round_up(n, m):
    return ((n + m - 1) // m) * m


# ----------------------------------------------------------------------------
# Pallas kernel: 3 bf16 MXU matmuls (f32 accumulate) + 2 LeakyReLUs.
# BatchNorms / conv / flatten are pre-folded into the weights.
# ----------------------------------------------------------------------------
def cnn_fused_kernel(x_ref, w1_ref, b1_ref, wc_ref, bc_ref, wo_ref, bo_ref, o_ref):
    # l1: Linear (+ Dropout eval = identity) -> LeakyReLU(0.1). BN1 folded downstream.
    x = x_ref[...].astype(jnp.bfloat16)
    h = jnp.dot(x, w1_ref[...], preferred_element_type=jnp.float32) + b1_ref[...]
    h = jnp.maximum(h, LEAKY_SLOPE * h)

    # c1: view+Conv1d(pad=1) folded into one wide (Hp, L*Hp) matmul (BN1 folded in),
    #     Dropout eval = identity, LeakyReLU(0.1). BN2 folded downstream.
    y = jnp.dot(h.astype(jnp.bfloat16), wc_ref[...],
                preferred_element_type=jnp.float32) + bc_ref[...]
    y = jnp.maximum(y, LEAKY_SLOPE * y)

    # out: flatten + Linear folded into one (L*Hp, O) matmul (BN2 folded in).
    o = jnp.dot(y.astype(jnp.bfloat16), wo_ref[...],
                preferred_element_type=jnp.float32) + bo_ref[...]
    o_ref[...] = o.astype(o_ref.dtype)


# ----------------------------------------------------------------------------
# One-time host-side parameter folding + padding (numpy; cache the result)
# ----------------------------------------------------------------------------
def fold_and_pad_params(params, *, n_feature, n_hidden, n_output, n_cnn_kernel,
                        n_mult_factor=N_MULT_FACTOR, lane=128,
                        weight_dtype=jnp.bfloat16):
    F, H, O, K, M = n_feature, n_hidden, n_output, n_cnn_kernel, n_mult_factor
    L = M - K + 3  # Conv1d output length (stride=1, padding=1)
    assert H == F * M, "x.view(B, n_feature, n_mult_factor) requires n_hidden == n_feature * n_mult_factor"

    p = {k: np.asarray(v, np.float32) for k, v in params.items()}

    # eval-mode BN scale/shift
    s1 = p["bn1_g"] / np.sqrt(p["bn1_v"] + BN_EPS)
    t1 = p["bn1_b"] - p["bn1_m"] * s1
    s2 = p["bn2_g"] / np.sqrt(p["bn2_v"] + BN_EPS)
    t2 = p["bn2_b"] - p["bn2_m"] * s2

    # fold view(B,F,M) + Conv1d(pad=1) into per-position (H, H) weights:
    # conv out[b,o,t] = bias[o] + sum_{c,k} w[o,c,k] * h[b, c*M + (t+k-1)]  (valid pos only)
    conv_w = p["c1_w"]                         # (H, F, K) torch layout
    weff = np.zeros((L, H, H), np.float32)
    cols = np.arange(F) * M
    for t in range(L):
        for k in range(K):
            pos = t + k - 1                    # padding = 1
            if 0 <= pos < M:
                weff[t, cols + pos, :] += conv_w[:, :, k].T

    # fold BN1 into the conv weights/bias and concatenate positions -> one wide matmul
    wc_all = np.concatenate([s1[:, None] * weff[t] for t in range(L)], axis=1)   # (H, L*H)
    bc_all = np.concatenate([t1 @ weff[t] + p["c1_b"] for t in range(L)])        # (L*H,)

    # flatten (B,H,L)->(B,H*L) then Linear == stack of per-position (H,O) slices;
    # fold BN2 into them and stack -> one (L*H, O) matmul
    wout = p["out_w"].T                         # (H*L, O), row index = h*L + t
    wout_t = [wout[t::L, :] for t in range(L)]  # each (H, O)
    wo_all = np.concatenate([s2[:, None] * wout_t[t] for t in range(L)], axis=0)  # (L*H, O)
    bo_all = p["out_b"] + sum(t2 @ wout_t[t] for t in range(L))                   # (O,)

    # Pad only what is needed:
    #  * F -> multiple of 8 (sublane alignment of the input tile; usually a no-op),
    #  * internal dims H, L*H -> multiples of 128 (never touch HBM activations),
    #  * output dim O stays unpadded (lane-dense HBM bytes beat a masked vst here).
    F8 = _round_up(F, 8)
    Hp = _round_up(H, lane)
    LHp = _round_up(L * H, lane)

    def pad2(a, r, c):
        out = np.zeros((r, c), np.float32)
        out[:a.shape[0], :a.shape[1]] = a
        return out

    def padrow(a, c):
        out = np.zeros((1, c), np.float32)
        out[0, :a.shape[0]] = a
        return out

    return dict(
        w1=jnp.asarray(pad2(p["l1_w"].T, F8, Hp), weight_dtype),
        b1=jnp.asarray(padrow(p["l1_b"], Hp)),                    # f32 bias
        wc=jnp.asarray(pad2(wc_all, Hp, LHp), weight_dtype),
        bc=jnp.asarray(padrow(bc_all, LHp)),
        wo=jnp.asarray(pad2(wo_all, LHp, O), weight_dtype),
        bo=jnp.asarray(padrow(bo_all, O)),
        dims=dict(F=F, O=O, F8=F8, Hp=Hp, LHp=LHp),
    )


# ----------------------------------------------------------------------------
# Batch-tile selection: large tiles (amortize the ~0.35 us/step overhead),
# 256-aligned for the v6e/v7x MXU pass height, and >= 2 grid steps for large
# batches so the v7x megacore actually shards the "parallel" axis.
# ----------------------------------------------------------------------------
def _choose_batch_tile(batch, tile_b):
    b8 = _round_up(batch, 8)
    tile_b = max(8, _round_up(tile_b, 8))
    if b8 <= tile_b:
        if b8 >= 512:
            # split into (at least) 2 steps for megacore, minimizing pad waste
            return _round_up((b8 + 1) // 2, 8)
        return b8
    if tile_b >= 256:
        return _round_up(tile_b, 256)
    return tile_b


# ----------------------------------------------------------------------------
# Wrapper: batch tiling + pallas_call (folded params are precomputed & cached)
# ----------------------------------------------------------------------------
def cnn_model_forward(x, folded, *, tile_b=1024, single_buffer_weights=False):
    d = folded["dims"]
    B, F = x.shape
    assert F == d["F"]
    F8, Hp, LHp, O = d["F8"], d["Hp"], d["LHp"], d["O"]

    TB = _choose_batch_tile(B, tile_b)
    Bp = _round_up(B, TB)

    xp = jnp.asarray(x, jnp.float32)
    if Bp != B or F8 != F:
        xp = jnp.pad(xp, ((0, Bp - B), (0, F8 - F)))   # tiny sublane/batch pad only

    # Explicit VMEM budget (bf16 weights + f32 biases, double-buffered I/O tiles,
    # f32 intermediates + their bf16 casts), with headroom under v7x's 64 MiB.
    wbytes = 2 * (F8 * Hp + Hp * LHp + LHp * O) + 4 * (Hp + LHp + O)
    io_bytes = 2 * 4 * (TB * F8 + TB * O)
    act_bytes = 6 * TB * (Hp + LHp)
    vmem_limit = int(min(max(2 * (2 * wbytes + io_bytes + act_bytes) + (8 << 20),
                             32 << 20), 48 << 20))

    # Resident weights: constant index_map => fetched once. Optionally single-buffer
    # them (pl.Buffered(1)) to halve their VMEM footprint on v7x for large configs.
    wkw = dict(pipeline_mode=pl.Buffered(1)) if single_buffer_weights else {}

    out = pl.pallas_call(
        cnn_fused_kernel,
        out_shape=jax.ShapeDtypeStruct((Bp, O), jnp.float32),
        grid_spec=pl.GridSpec(
            grid=(Bp // TB,),
            in_specs=[
                pl.BlockSpec((TB, F8), lambda i: (i, 0)),          # x: tiled over batch
                pl.BlockSpec((F8, Hp), lambda i: (0, 0), **wkw),   # weights: resident
                pl.BlockSpec((1, Hp), lambda i: (0, 0), **wkw),
                pl.BlockSpec((Hp, LHp), lambda i: (0, 0), **wkw),
                pl.BlockSpec((1, LHp), lambda i: (0, 0), **wkw),
                pl.BlockSpec((LHp, O), lambda i: (0, 0), **wkw),
                pl.BlockSpec((1, O), lambda i: (0, 0), **wkw),
            ],
            out_specs=pl.BlockSpec((TB, O), lambda i: (i, 0)),     # natural O width
        ),
        compiler_params=pltpu.CompilerParams(
            dimension_semantics=("parallel",),   # megacore sharding on v7x
            vmem_limit_bytes=vmem_limit,
        ),
    )(xp, folded["w1"], folded["b1"], folded["wc"], folded["bc"],
      folded["wo"], folded["bo"])

    return out[:B]


# ----------------------------------------------------------------------------
# Pure-JAX reference (mirrors the literal PyTorch forward, eval mode)
# ----------------------------------------------------------------------------
def forward_reference(x, params, *, n_feature, n_hidden, n_output, n_cnn_kernel,
                      n_mult_factor=N_MULT_FACTOR):
    B = x.shape[0]
    L = n_mult_factor - n_cnn_kernel + 3
    h = x @ params["l1_w"].T + params["l1_b"]
    h = jnp.where(h >= 0, h, LEAKY_SLOPE * h)
    h = (h - params["bn1_m"]) / jnp.sqrt(params["bn1_v"] + BN_EPS) * params["bn1_g"] + params["bn1_b"]
    hr = h.reshape(B, n_feature, n_mult_factor)
    hp = jnp.pad(hr, ((0, 0), (0, 0), (1, 1)))
    w = params["c1_w"]  # (H, F, K)
    y = jnp.stack(
        [jnp.einsum("bfk,hfk->bh", hp[:, :, t:t + n_cnn_kernel], w) for t in range(L)],
        axis=-1) + params["c1_b"][None, :, None]
    y = jnp.where(y >= 0, y, LEAKY_SLOPE * y)
    y = ((y - params["bn2_m"][None, :, None])
         / jnp.sqrt(params["bn2_v"][None, :, None] + BN_EPS)
         * params["bn2_g"][None, :, None] + params["bn2_b"][None, :, None])
    yf = y.reshape(B, n_hidden * L)
    return yf @ params["out_w"].T + params["out_b"]


# ----------------------------------------------------------------------------
# Deterministic parameter init (shapes match the torch module's __init__)
# ----------------------------------------------------------------------------
def init_params(key, n_feature, n_hidden, n_output, n_cnn_kernel,
                n_mult_factor=N_MULT_FACTOR):
    L = n_mult_factor - n_cnn_kernel + 3
    n_l2_hidden = n_hidden * L
    ks = jax.random.split(key, 6)

    def unif(k, shape, fan_in):
        b = 1.0 / np.sqrt(fan_in)
        return jax.random.uniform(k, shape, jnp.float32, -b, b)

    return {
        "l1_w": unif(ks[0], (n_hidden, n_feature), n_feature),
        "l1_b": unif(ks[1], (n_hidden,), n_feature),
        "bn1_g": jnp.ones((n_hidden,), jnp.float32),
        "bn1_b": jnp.zeros((n_hidden,), jnp.float32),
        "bn1_m": jnp.zeros((n_hidden,), jnp.float32),
        "bn1_v": jnp.ones((n_hidden,), jnp.float32),
        "c1_w": unif(ks[2], (n_hidden, n_feature, n_cnn_kernel), n_feature * n_cnn_kernel),
        "c1_b": unif(ks[3], (n_hidden,), n_feature * n_cnn_kernel),
        "bn2_g": jnp.ones((n_hidden,), jnp.float32),
        "bn2_b": jnp.zeros((n_hidden,), jnp.float32),
        "bn2_m": jnp.zeros((n_hidden,), jnp.float32),
        "bn2_v": jnp.ones((n_hidden,), jnp.float32),
        "out_w": unif(ks[4], (n_output, n_l2_hidden), n_l2_hidden),
        "out_b": unif(ks[5], (n_output,), n_l2_hidden),
    }


if __name__ == "__main__":
    # small shapes: view(B, n_feature, 2) requires n_hidden == 2 * n_feature
    n_feature, n_mult_factor = 16, N_MULT_FACTOR
    n_hidden = n_feature * n_mult_factor          # 32
    n_cnn_kernel = 3
    n_output = 8
    batch = 20                                     # exercises the batch-padding path

    key = jax.random.PRNGKey(0)
    kx, kp = jax.random.split(key)
    x = jax.random.normal(kx, (batch, n_feature), jnp.float32)
    params = init_params(kp, n_feature, n_hidden, n_output, n_cnn_kernel, n_mult_factor)

    cfg = dict(n_feature=n_feature, n_hidden=n_hidden, n_output=n_output,
               n_cnn_kernel=n_cnn_kernel, n_mult_factor=n_mult_factor)

    # one-time host-side fold (cache this across calls); weights stored as bf16
    folded = fold_and_pad_params(params, **cfg)

    ref = jax.block_until_ready(forward_reference(x, params, **cfg))

    # default path: one large batch tile
    out = jax.block_until_ready(cnn_model_forward(x, folded))
    np.testing.assert_allclose(np.asarray(out), np.asarray(ref), rtol=2e-2, atol=2e-2)

    # multi-step grid path (exercises batch tiling / "parallel" grid axis)
    out2 = jax.block_until_ready(cnn_model_forward(x, folded, tile_b=8))
    np.testing.assert_allclose(np.asarray(out2), np.asarray(ref), rtol=2e-2, atol=2e-2)

    print("KERNEL_OK")
</pallas_src>

<mosaic_0001>
module attributes {stable_mosaic.version = 11 : i64} {
  func.func @cnn_fused_kernel(%arg0: i32, %arg1: memref<24x16xf32, #tpu.memory_space<vmem>>, %arg2: memref<16x128xbf16, #tpu.memory_space<vmem>>, %arg3: memref<1x128xf32, #tpu.memory_space<vmem>>, %arg4: memref<128x128xbf16, #tpu.memory_space<vmem>>, %arg5: memref<1x128xf32, #tpu.memory_space<vmem>>, %arg6: memref<128x8xbf16, #tpu.memory_space<vmem>>, %arg7: memref<1x8xf32, #tpu.memory_space<vmem>>, %arg8: memref<24x8xf32, #tpu.memory_space<vmem>>) attributes {dimension_semantics = [#tpu.dimension_semantics<parallel>], iteration_bounds = array<i64: 1>, scalar_prefetch = 0 : i64, scratch_operands = 0 : i64, tpu.core_type = #tpu.core_type<tc>, window_params = [{transform_indices = @transform_0, window_bounds = array<i64: 24, 16>}, {pipeline_mode = #tpu.pipeline_mode<synchronous>, transform_indices = @transform_1, window_bounds = array<i64: 16, 128>}, {pipeline_mode = #tpu.pipeline_mode<synchronous>, transform_indices = @transform_2, window_bounds = array<i64: 1, 128>}, {pipeline_mode = #tpu.pipeline_mode<synchronous>, transform_indices = @transform_3, window_bounds = array<i64: 128, 128>}, {pipeline_mode = #tpu.pipeline_mode<synchronous>, transform_indices = @transform_4, window_bounds = array<i64: 1, 128>}, {pipeline_mode = #tpu.pipeline_mode<synchronous>, transform_indices = @transform_5, window_bounds = array<i64: 128, 8>}, {pipeline_mode = #tpu.pipeline_mode<synchronous>, transform_indices = @transform_6, window_bounds = array<i64: 1, 8>}, {transform_indices = @transform_7, window_bounds = array<i64: 24, 8>}]} {
    %c0 = arith.constant 0 : index
    %c0_0 = arith.constant 0 : index
    %0 = vector.load %arg1[%c0, %c0_0] : memref<24x16xf32, #tpu.memory_space<vmem>>, vector<24x16xf32>
    %1 = arith.truncf %0 : vector<24x16xf32> to vector<24x16xbf16>
    %c0_1 = arith.constant 0 : index
    %c0_2 = arith.constant 0 : index
    %2 = vector.load %arg2[%c0_1, %c0_2] : memref<16x128xbf16, #tpu.memory_space<vmem>>, vector<16x128xbf16>
    %cst = arith.constant dense<0.000000e+00> : vector<24x128xf32>
    %3 = tpu.matmul %1, %2, %cst {dimension_numbers = #tpu.dot_dimension_numbers<[1], [0], [0], [1], [0, 0, 1, 1], [], []>} : vector<24x16xbf16>, vector<16x128xbf16>, vector<24x128xf32> -> vector<24x128xf32>
    %c0_3 = arith.constant 0 : index
    %c0_4 = arith.constant 0 : index
    %4 = vector.load %arg3[%c0_3, %c0_4] : memref<1x128xf32, #tpu.memory_space<vmem>>, vector<1x128xf32>
    %5 = vector.broadcast %4 : vector<1x128xf32> to vector<24x128xf32>
    %6 = arith.addf %3, %5 : vector<24x128xf32>
    %cst_5 = arith.constant 1.000000e-01 : f32
    %7 = vector.broadcast %cst_5 : f32 to vector<24x128xf32>
    %8 = arith.mulf %7, %6 : vector<24x128xf32>
    %9 = arith.maximumf %6, %8 : vector<24x128xf32>
    %10 = arith.truncf %9 : vector<24x128xf32> to vector<24x128xbf16>
    %c0_6 = arith.constant 0 : index
    %c0_7 = arith.constant 0 : index
    %11 = vector.load %arg4[%c0_6, %c0_7] : memref<128x128xbf16, #tpu.memory_space<vmem>>, vector<128x128xbf16>
    %cst_8 = arith.constant dense<0.000000e+00> : vector<24x128xf32>
    %12 = tpu.matmul %10, %11, %cst_8 {dimension_numbers = #tpu.dot_dimension_numbers<[1], [0], [0], [1], [0, 0, 1, 1], [], []>} : vector<24x128xbf16>, vector<128x128xbf16>, vector<24x128xf32> -> vector<24x128xf32>
    %c0_9 = arith.constant 0 : index
    %c0_10 = arith.constant 0 : index
    %13 = vector.load %arg5[%c0_9, %c0_10] : memref<1x128xf32, #tpu.memory_space<vmem>>, vector<1x128xf32>
    %14 = vector.broadcast %13 : vector<1x128xf32> to vector<24x128xf32>
    %15 = arith.addf %12, %14 : vector<24x128xf32>
    %cst_11 = arith.constant 1.000000e-01 : f32
    %16 = vector.broadcast %cst_11 : f32 to vector<24x128xf32>
    %17 = arith.mulf %16, %15 : vector<24x128xf32>
    %18 = arith.maximumf %15, %17 : vector<24x128xf32>
    %19 = arith.truncf %18 : vector<24x128xf32> to vector<24x128xbf16>
    %c0_12 = arith.constant 0 : index
    %c0_13 = arith.constant 0 : index
    %20 = vector.load %arg6[%c0_12, %c0_13] : memref<128x8xbf16, #tpu.memory_space<vmem>>, vector<128x8xbf16>
    %cst_14 = arith.constant dense<0.000000e+00> : vector<24x8xf32>
    %21 = tpu.matmul %19, %20, %cst_14 {dimension_numbers = #tpu.dot_dimension_numbers<[1], [0], [0], [1], [0, 0, 1, 1], [], []>} : vector<24x128xbf16>, vector<128x8xbf16>, vector<24x8xf32> -> vector<24x8xf32>
    %c0_15 = arith.constant 0 : index
    %c0_16 = arith.constant 0 : index
    %22 = vector.load %arg7[%c0_15, %c0_16] : memref<1x8xf32, #tpu.memory_space<vmem>>, vector<1x8xf32>
    %23 = vector.broadcast %22 : vector<1x8xf32> to vector<24x8xf32>
    %24 = arith.addf %21, %23 : vector<24x8xf32>
    %c0_17 = arith.constant 0 : index
    %c0_18 = arith.constant 0 : index
    %25 = vector.load %arg8[%c0_17, %c0_18] : memref<24x8xf32, #tpu.memory_space<vmem>>, vector<24x8xf32>
    tpu.vector_store %arg8[%c0_17, %c0_18], %24 {strides = array<i32>} : memref<24x8xf32, #tpu.memory_space<vmem>>, vector<24x8xf32>,
    return
  }
  func.func @transform_0(%arg0: i32) -> (i32, i32) {
    %c0_i32 = arith.constant 0 : i32
    %c0_i32_0 = arith.constant 0 : i32
    return %arg0, %c0_i32 : i32, i32
  }
  func.func @transform_1(%arg0: i32) -> (i32, i32) {
    %c0_i32 = arith.constant 0 : i32
    %c0_i32_0 = arith.constant 0 : i32
    %c0_i32_1 = arith.constant 0 : i32
    return %c0_i32, %c0_i32_0 : i32, i32
  }
  func.func @transform_2(%arg0: i32) -> (i32, i32) {
    %c0_i32 = arith.constant 0 : i32
    %c0_i32_0 = arith.constant 0 : i32
    %c0_i32_1 = arith.constant 0 : i32
    return %c0_i32, %c0_i32_0 : i32, i32
  }
  func.func @transform_3(%arg0: i32) -> (i32, i32) {
    %c0_i32 = arith.constant 0 : i32
    %c0_i32_0 = arith.constant 0 : i32
    %c0_i32_1 = arith.constant 0 : i32
    return %c0_i32, %c0_i32_0 : i32, i32
  }
  func.func @transform_4(%arg0: i32) -> (i32, i32) {
    %c0_i32 = arith.constant 0 : i32
    %c0_i32_0 = arith.constant 0 : i32
    %c0_i32_1 = arith.constant 0 : i32
    return %c0_i32, %c0_i32_0 : i32, i32
  }
  func.func @transform_5(%arg0: i32) -> (i32, i32) {
    %c0_i32 = arith.constant 0 : i32
    %c0_i32_0 = arith.constant 0 : i32
    %c0_i32_1 = arith.constant 0 : i32
    return %c0_i32, %c0_i32_0 : i32, i32
  }
  func.func @transform_6(%arg0: i32) -> (i32, i32) {
    %c0_i32 = arith.constant 0 : i32
    %c0_i32_0 = arith.constant 0 : i32
    %c0_i32_1 = arith.constant 0 : i32
    return %c0_i32, %c0_i32_0 : i32, i32
  }
  func.func @transform_7(%arg0: i32) -> (i32, i32) {
    %c0_i32 = arith.constant 0 : i32
    %c0_i32_0 = arith.constant 0 : i32
    return %arg0, %c0_i32 : i32, i32
  }
}

</mosaic_0001>

<llo_original>
// kernel: tpu_custom_call.1
$region0: #{tpu_custom_call.1}
  #allocation0 [shape = 'u32[]', space=smem, size = 0x4, offset = 0x4, fixed_abs, tag = 'smem constant byte address 0x4 - core index']
  #allocation1 [shape = 'u32[72,128]{1,0:T(1,128)}', space=vmem, size = 0x9000, scoped, tag = 'internal scratch']
  %s0 = inlined_call_operand.vmem [shape: f32[24,16], index: 0, kind: input, shape index: {}]
  %s1 = inlined_call_operand.vmem [shape: bf16[16,128], index: 1, kind: input, shape index: {}]
  %s2 = inlined_call_operand.vmem [shape: f32[1,128], index: 2, kind: input, shape index: {}]
  %s3 = inlined_call_operand.vmem [shape: bf16[128,128], index: 3, kind: input, shape index: {}]
  %s4 = inlined_call_operand.vmem [shape: f32[1,128], index: 4, kind: input, shape index: {}]
  %s5 = inlined_call_operand.vmem [shape: bf16[128,8], index: 5, kind: input, shape index: {}]
  %s6 = inlined_call_operand.vmem [shape: f32[1,8], index: 6, kind: input, shape index: {}]
  %s7 = inlined_call_operand.vmem [shape: f32[24,8], index: 7, kind: output, shape index: {}]
  %s8 = sld [smem:[#allocation0]]
  $region38: #{tpu_custom_call.1} parent=0
    _
  %s10 = ssub.s32 1, %s8
  %s11 = scalar_select 0, %s10, %s8
  // Predicated region
  $region2: #{tpu_custom_call.1} parent=0 // pred_check
    _
  $region3: #{tpu_custom_call.1} parent=0 // pred_check_branch
    %13 = sbr.rel (0) target = $region5
  $region4: #{tpu_custom_call.1} parent=0 // pred_region
    _
  $region5: #{tpu_custom_call.1} parent=0 // pred_fallthru
    _
  // Predicated region
  $region6: #{tpu_custom_call.1} parent=0 // pred_check
    _
  $region7: #{tpu_custom_call.1} parent=0 // pred_check_branch
    %15 = sbr.rel (0) target = $region9
  $region8: #{tpu_custom_call.1} parent=0 // pred_region
    _
  $region9: #{tpu_custom_call.1} parent=0 // pred_fallthru
    _
  // Predicated region
  $region10: #{tpu_custom_call.1} parent=0 // pred_check
    _
  $region11: #{tpu_custom_call.1} parent=0 // pred_check_branch
    %17 = sbr.rel (0) target = $region13
  $region12: #{tpu_custom_call.1} parent=0 // pred_region
    _
  $region13: #{tpu_custom_call.1} parent=0 // pred_fallthru
    _
  // Predicated region
  $region14: #{tpu_custom_call.1} parent=0 // pred_check
    _
  $region15: #{tpu_custom_call.1} parent=0 // pred_check_branch
    %19 = sbr.rel (0) target = $region17
  $region16: #{tpu_custom_call.1} parent=0 // pred_region
    _
  $region17: #{tpu_custom_call.1} parent=0 // pred_fallthru
    _
  // Predicated region
  $region18: #{tpu_custom_call.1} parent=0 // pred_check
    _
  $region19: #{tpu_custom_call.1} parent=0 // pred_check_branch
    %21 = sbr.rel (0) target = $region21
  $region20: #{tpu_custom_call.1} parent=0 // pred_region
    _
  $region21: #{tpu_custom_call.1} parent=0 // pred_fallthru
    _
  // Predicated region
  $region22: #{tpu_custom_call.1} parent=0 // pred_check
    _
  $region23: #{tpu_custom_call.1} parent=0 // pred_check_branch
    %23 = sbr.rel (0) target = $region25
  $region24: #{tpu_custom_call.1} parent=0 // pred_region
    _
  $region25: #{tpu_custom_call.1} parent=0 // pred_fallthru
    _
  // Predicated region
  $region26: #{tpu_custom_call.1} parent=0 // pred_check
    _
  $region27: #{tpu_custom_call.1} parent=0 // pred_check_branch
    %25 = sbr.rel (0) target = $region29
  $region28: #{tpu_custom_call.1} parent=0 // pred_region
    _
  $region29: #{tpu_custom_call.1} parent=0 // pred_fallthru
    _
  %v27 = vld [vmem:[%s0] sm:$0xff]
  %v28 = vld [vmem:[%s0 + $0x8] sm:$0xff]
  %v29 = vld [vmem:[%s0 + $0x10] sm:$0xff]
  %v30 = vpack.c.bf16 %v28, %v27
  %v31 = vpack.c.bf16 %v29, %v29
  %v32 = vld [vmem:[%s1] sm:$0xf]
  %v33 = vld [vmem:[%s1 + $0x4] sm:$0xf]
  %v34 = vld [vmem:[%s2] sm:$0x1]
  %v36 = vperm.slane %v34, 0
  %v40 = vunpack.c.l.b16 %v32
  %v41 = vunpack.c.l.b16 %v33
  %v42 = vpack.c.b16 %v41, %v40
  %vm44 = vcmask 130048
  %v46 = vsel %vm44, %v30, 0
  %v49 = vsel %vm44, %v31, 0
  %51 = vmatpush.bf16.msra.mxu0 0
  %52 = vmatpush.bf16.msra.mxu0 0
  %53 = vmatpush.bf16.msra.mxu0 0
  %54 = vmatpush.bf16.msra.mxu0 0
  %55 = vmatpush.bf16.msra.mxu0 0
  %56 = vmatpush.bf16.msra.mxu0 0
  %57 = vmatpush.bf16.msra.mxu0 0
  %58 = vmatpush.bf16.msra.mxu0 %v42
  %59 = vmatmul.bf16.gmra.mxu0 %v46
  %v60 = vpop.f32.mrf.mxu0
  %v61 = vadd.f32 %v36, %v60
  %v62 = vpop.f32.mrf.mxu0
  %v63 = vadd.f32 %v36, %v62
  %64 = vmatmul.bf16.gmra.mxu0 %v49
  %v65 = vpop.f32.mrf.mxu0
  %v66 = vadd.f32 %v36, %v65
  %v67 = vpop.f32.mrf.mxu0
  %68 = vdwg.mxu0
  %v69 = vmul.f32 %v61, 0.1
  %v70 = vmul.f32 %v63, 0.1
  %v71 = vmul.f32 %v66, 0.1
  %v72 = vmax.f32 %v61, %v69
  %v73 = vmax.f32 %v63, %v70
  %v74 = vmax.f32 %v66, %v71
  %v75 = vpack.c.bf16 %v73, %v72
  %v76 = vpack.c.bf16 %v74, %v74
  %v77 = vld [vmem:[%s3] sm:$0xf]
  %v78 = vld [vmem:[%s3 + $0x4] sm:$0xf]
  %v79 = vld [vmem:[%s3 + $0x8] sm:$0xf]
  %v80 = vld [vmem:[%s3 + $0xc] sm:$0xf]
  %v81 = vld [vmem:[%s3 + $0x10] sm:$0xf]
  %v82 = vld [vmem:[%s3 + $0x14] sm:$0xf]
  %v83 = vld [vmem:[%s3 + $0x18] sm:$0xf]
  %v84 = vld [vmem:[%s3 + $0x1c] sm:$0xf]
  %v85 = vld [vmem:[%s3 + $0x20] sm:$0xf]
  %v86 = vld [vmem:[%s3 + $0x24] sm:$0xf]
  %v87 = vld [vmem:[%s3 + $0x28] sm:$0xf]
  %v88 = vld [vmem:[%s3 + $0x2c] sm:$0xf]
  %v89 = vld [vmem:[%s3 + $0x30] sm:$0xf]
  %v90 = vld [vmem:[%s3 + $0x34] sm:$0xf]
  %v91 = vld [vmem:[%s3 + $0x38] sm:$0xf]
  %v92 = vld [vmem:[%s3 + $0x3c] sm:$0xf]
  %v93 = vld [vmem:[%s4] sm:$0x1]
  %v95 = vperm.slane %v93, 0
  %v113 = vunpack.c.l.b16 %v77
  %v114 = vunpack.c.l.b16 %v78
  %v115 = vunpack.c.l.b16 %v79
  %v116 = vunpack.c.l.b16 %v80
  %v117 = vunpack.c.l.b16 %v81
  %v118 = vunpack.c.l.b16 %v82
  %v119 = vunpack.c.l.b16 %v83
  %v120 = vunpack.c.l.b16 %v84
  %v121 = vunpack.c.l.b16 %v85
  %v122 = vunpack.c.l.b16 %v86
  %v123 = vunpack.c.l.b16 %v87
  %v124 = vunpack.c.l.b16 %v88
  %v125 = vunpack.c.l.b16 %v89
  %v126 = vunpack.c.l.b16 %v90
  %v127 = vunpack.c.l.b16 %v91
  %v128 = vunpack.c.l.b16 %v92
  %v129 = vpack.c.b16 %v114, %v113
  %v130 = vpack.c.b16 %v116, %v115
  %v131 = vpack.c.b16 %v118, %v117
  %v132 = vpack.c.b16 %v120, %v119
  %v133 = vpack.c.b16 %v122, %v121
  %v134 = vpack.c.b16 %v124, %v123
  %v135 = vpack.c.b16 %v126, %v125
  %v136 = vpack.c.b16 %v128, %v127
  %145 = vmatpush.bf16.msra.mxu0 %v136
  %146 = vmatpush.bf16.msra.mxu0 %v135
  %147 = vmatpush.bf16.msra.mxu0 %v134
  %148 = vmatpush.bf16.msra.mxu0 %v133
  %149 = vmatpush.bf16.msra.mxu0 %v132
  %150 = vmatpush.bf16.msra.mxu0 %v131
  %151 = vmatpush.bf16.msra.mxu0 %v130
  %152 = vmatpush.bf16.msra.mxu0 %v129
  %153 = vmatmul.bf16.gmra.mxu0 %v75
  %v154 = vpop.f32.mrf.mxu0
  %v155 = vadd.f32 %v95, %v154
  %v156 = vpop.f32.mrf.mxu0
  %v157 = vadd.f32 %v95, %v156
  %158 = vmatmul.bf16.gmra.mxu0 %v76
  %v159 = vpop.f32.mrf.mxu0
  %v160 = vadd.f32 %v95, %v159
  %v161 = vpop.f32.mrf.mxu0
  %162 = vdwg.mxu0
  %v163 = vmul.f32 %v155, 0.1
  %v164 = vmul.f32 %v157, 0.1
  %v165 = vmul.f32 %v160, 0.1
  %v166 = vmax.f32 %v155, %v163
  %v167 = vmax.f32 %v157, %v164
  %v168 = vmax.f32 %v160, %v165
  %v169 = vpack.c.bf16 %v167, %v166
  %v170 = vpack.c.bf16 %v168, %v168
  %v171 = vld [vmem:[%s5] sm:$0xf]
  %v172 = vld [vmem:[%s5 + $0x4] sm:$0xf]
  %v173 = vld [vmem:[%s5 + $0x8] sm:$0xf]
  %v174 = vld [vmem:[%s5 + $0xc] sm:$0xf]
  %v175 = vld [vmem:[%s5 + $0x10] sm:$0xf]
  %v176 = vld [vmem:[%s5 + $0x14] sm:$0xf]
  %v177 = vld [vmem:[%s5 + $0x18] sm:$0xf]
  %v178 = vld [vmem:[%s5 + $0x1c] sm:$0xf]
  %v179 = vld [vmem:[%s5 + $0x20] sm:$0xf]
  %v180 = vld [vmem:[%s5 + $0x24] sm:$0xf]
  %v181 = vld [vmem:[%s5 + $0x28] sm:$0xf]
  %v182 = vld [vmem:[%s5 + $0x2c] sm:$0xf]
  %v183 = vld [vmem:[%s5 + $0x30] sm:$0xf]
  %v184 = vld [vmem:[%s5 + $0x34] sm:$0xf]
  %v185 = vld [vmem:[%s5 + $0x38] sm:$0xf]
  %v186 = vld [vmem:[%s5 + $0x3c] sm:$0xf]
  %v187 = vld [vmem:[%s6] sm:$0x1]
  %v189 = vperm.slane %v187, 0
  %v207 = vunpack.c.l.b16 %v171
  %v208 = vunpack.c.l.b16 %v172
  %v209 = vunpack.c.l.b16 %v173
  %v210 = vunpack.c.l.b16 %v174
  %v211 = vunpack.c.l.b16 %v175
  %v212 = vunpack.c.l.b16 %v176
  %v213 = vunpack.c.l.b16 %v177
  %v214 = vunpack.c.l.b16 %v178
  %v215 = vunpack.c.l.b16 %v179
  %v216 = vunpack.c.l.b16 %v180
  %v217 = vunpack.c.l.b16 %v181
  %v218 = vunpack.c.l.b16 %v182
  %v219 = vunpack.c.l.b16 %v183
  %v220 = vunpack.c.l.b16 %v184
  %v221 = vunpack.c.l.b16 %v185
  %v222 = vunpack.c.l.b16 %v186
  %v223 = vpack.c.b16 %v208, %v207
  %v224 = vpack.c.b16 %v210, %v209
  %v225 = vpack.c.b16 %v212, %v211
  %v226 = vpack.c.b16 %v214, %v213
  %v227 = vpack.c.b16 %v216, %v215
  %v228 = vpack.c.b16 %v218, %v217
  %v229 = vpack.c.b16 %v220, %v219
  %v230 = vpack.c.b16 %v222, %v221
  %239 = vmatpush.bf16.msra.mxu0 %v230
  %240 = vmatpush.bf16.msra.mxu0 %v229
  %241 = vmatpush.bf16.msra.mxu0 %v228
  %242 = vmatpush.bf16.msra.mxu0 %v227
  %243 = vmatpush.bf16.msra.mxu0 %v226
  %244 = vmatpush.bf16.msra.mxu0 %v225
  %245 = vmatpush.bf16.msra.mxu0 %v224
  %246 = vmatpush.bf16.msra.mxu0 %v223
  %247 = vmatmul.bf16.gmra.mxu0 %v169
  %v248 = vpop.f32.mrf.mxu0
  %v249 = vadd.f32 %v189, %v248
  %v250 = vpop.f32.mrf.mxu0
  %v251 = vadd.f32 %v189, %v250
  %252 = vmatmul.bf16.gmra.mxu0 %v170
  %v253 = vpop.f32.mrf.mxu0
  %v254 = vadd.f32 %v189, %v253
  %v255 = vpop.f32.mrf.mxu0
  %256 = vdwg.mxu0
  %vm257 = vcmask 64512
  %258 = vst.msk [vmem:[%s7] sm:$0xff] %vm257, %v249
  %259 = vst.msk [vmem:[%s7 + $0x8] sm:$0xff] %vm257, %v251
  %260 = vst.msk [vmem:[%s7 + $0x10] sm:$0xff] %vm257, %v254
  // Predicated region
  $region30: #{tpu_custom_call.1} parent=0 // pred_check
    _
  $region31: #{tpu_custom_call.1} parent=0 // pred_check_branch
    %262 = sbr.rel (0) target = $region33
  $region32: #{tpu_custom_call.1} parent=0 // pred_region
    _
  $region33: #{tpu_custom_call.1} parent=0 // pred_fallthru
    _
  // Predicated region
  $region34: #{tpu_custom_call.1} parent=0 // pred_check
    _
  $region35: #{tpu_custom_call.1} parent=0 // pred_check_branch
    %264 = sbr.rel (0) target = $region37
  $region36: #{tpu_custom_call.1} parent=0 // pred_region
    _
  $region37: #{tpu_custom_call.1} parent=0 // pred_fallthru
    _

</llo_original>
